<compile_context>
chip_gen: v7x
topology: tpu7x:2x2x1
jax: 0.10.0
libtpu: 0.0.40
codegen_flags: <defaults>
</compile_context>

<pallas_src>
import jax
import jax.numpy as jnp
from jax.experimental import pallas as pl
from jax.experimental.pallas import tpu as pltpu


def _pos_enc_kernel(x_ref, emb_ref, o_ref):
    # x_ref / o_ref : (TB, TC) lane-dense block of the flattened [B, S*D] input.
    # emb_ref       : (1, TC)  matching column block of the flattened positional
    #                 embedding; carries the broadcast dim already, so the add
    #                 broadcasts over rows with no explicit broadcast_in_dim.
    o_ref[...] = x_ref[...] + emb_ref[...]


def _pick_tile(extent, unit, target):
    """Block edge for one axis.

    Returns the full extent when it fits the target (full-dim blocks are always
    legal regardless of alignment); otherwise the largest multiple of `unit`
    not exceeding `target`.  The tile need not divide the extent — the pl.cdiv
    grid plus Pallas partial-block masking handles the remainder correctly.
    """
    if extent <= target:
        return extent
    tile = (target // unit) * unit
    return tile if tile > 0 else extent


def positional_encoding(
    x,
    emb_weight,
    *,
    max_block_bytes=8 * 1024 * 1024,
    small_fast_path_bytes=4 * 1024 * 1024,
    force_pallas=False,
    donate_x=False,
):
    """
    x:          [B, S, D] (batched=True convention)
    emb_weight: [num_positions, D] (nn.Embedding weight), num_positions >= S
    returns     [B, S, D] = x + emb_weight[:S][None, :, :]
    """
    B, S, D = x.shape
    dtype = x.dtype
    itemsize = jnp.dtype(dtype).itemsize
    C = S * D
    total_bytes = B * C * itemsize

    # Keep the add in the input dtype (no upcast; there is no accumulation).
    emb_slab = emb_weight[:S, :].astype(dtype)

    # --- Small-shape fast path -------------------------------------------
    # Below a few MiB the pallas_call fixed cost dominates and prevents XLA
    # from fusing this trivial add into neighbouring ops; plain XLA wins.
    if not force_pallas and total_bytes < small_fast_path_bytes:
        return x + emb_slab[None, :, :]

    # --- Pallas path (large inputs, HBM-bandwidth bound) ------------------
    # Lane-dense layouts.  The reshapes are free (contiguous) bitcasts.
    x2d = x.reshape(B, C)
    emb2d = emb_slab.reshape(1, C)

    # Row tile: multiple of 8 (or full extent).  Cap at 256 rows so the
    # column tile can stay wide.
    TB = _pick_tile(B, 8, 256)
    # Megacore (v7x has 2 TCs with per-TC HBM paths): guarantee >= 2 row
    # iterations when there are enough rows to split; costs nothing on
    # single-TC v5e/v6e.
    if pl.cdiv(B, TB) == 1 and B >= 16:
        TB = max(8, (((B + 1) // 2 + 7) // 8) * 8)

    # Column tile: multiple of 128 (or full extent), sized so one block is at
    # most ~max_block_bytes.
    col_target = max(128, max_block_bytes // max(1, TB * itemsize))
    TC = _pick_tile(C, 128, col_target)

    n_row = pl.cdiv(B, TB)
    n_col = pl.cdiv(C, TC)

    # If the grid still collapsed to a single point on a wide input (rows
    # couldn't be split), split the column axis for megacore.
    if n_row == 1 and n_col == 1 and C >= 256 and C * itemsize >= (1 << 20):
        TC = max(128, (((C + 1) // 2 + 127) // 128) * 128)
        n_col = pl.cdiv(C, TC)

    # VMEM footprint: double-buffered x + out blocks, double-buffered emb row.
    block_bytes = TB * TC * itemsize
    emb_block_bytes = TC * itemsize
    footprint = 4 * block_bytes + 2 * emb_block_bytes
    # 25% + 2 MiB headroom for Mosaic scratch; default blocks keep this
    # ~40 MiB, inside v7x's 64 MiB physical VMEM and v5e's need for an
    # explicit override of its 16 MiB scoped default.
    vmem_limit = min(96 * 1024 * 1024, int(footprint * 5 // 4) + (2 << 20))

    grid_spec = pltpu.PrefetchScalarGridSpec(
        num_scalar_prefetch=0,
        # Columns outermost so the (1, TC) embedding block index is constant
        # across the inner row loop -> loaded once per column tile, resident.
        grid=(n_col, n_row),
        in_specs=[
            pl.BlockSpec((TB, TC), lambda j, i: (i, j)),  # x
            pl.BlockSpec((1, TC), lambda j, i: (0, j)),   # positional emb
        ],
        out_specs=pl.BlockSpec((TB, TC), lambda j, i: (i, j)),
    )

    out2d = pl.pallas_call(
        _pos_enc_kernel,
        out_shape=jax.ShapeDtypeStruct((B, C), dtype),
        grid_spec=grid_spec,
        compiler_params=pltpu.CompilerParams(
            dimension_semantics=("parallel", "parallel"),
            vmem_limit_bytes=vmem_limit,
        ),
        cost_estimate=pl.CostEstimate(
            flops=B * C,
            transcendentals=0,
            bytes_accessed=(2 * B * C + C) * itemsize,
        ),
        # Only alias when the caller donates x (halves HBM footprint of the
        # op; no change to kernel wall-clock).
        input_output_aliases=({0: 0} if donate_x else {}),
    )(x2d, emb2d)

    return out2d.reshape(B, S, D)


if __name__ == "__main__":
    # Module hyperparameters (mirror PositionalEncoding.__init__).
    d_model = 32
    num_positions = 20
    batch = 2
    seq_len = 8

    key = jax.random.PRNGKey(0)
    kx, kw = jax.random.split(key)

    # Deterministic parameter init: nn.Embedding default is N(0, 1).
    emb_weight = jax.random.normal(kw, (num_positions, d_model), dtype=jnp.float32)

    # Example input [batch, seq, d_model] (batched=True convention).
    x = jax.random.normal(kx, (batch, seq_len, d_model), dtype=jnp.float32)

    # Plain-JAX reference.
    ref = x + emb_weight[:seq_len][None, :, :]

    # Exercise the Pallas kernel explicitly (the auto dispatch would take the
    # small-shape XLA fast path at these demo sizes).
    out_pallas = positional_encoding(x, emb_weight, force_pallas=True)
    out_pallas = jax.block_until_ready(out_pallas)
    assert out_pallas.shape == x.shape
    assert jnp.allclose(out_pallas, ref, atol=1e-6), "pallas path mismatch vs reference"

    # Also check the auto-dispatch path (XLA fast path at this size).
    out_auto = jax.block_until_ready(positional_encoding(x, emb_weight))
    assert jnp.allclose(out_auto, ref, atol=1e-6), "fast path mismatch vs reference"

    print("KERNEL_OK")
</pallas_src>

<mosaic_0001>
module attributes {stable_mosaic.version = 11 : i64} {
  func.func @_pos_enc_kernel(%arg0: i32, %arg1: i32, %arg2: memref<2x256xf32, #tpu.memory_space<vmem>>, %arg3: memref<1x256xf32, #tpu.memory_space<vmem>>, %arg4: memref<2x256xf32, #tpu.memory_space<vmem>>) attributes {dimension_semantics = [#tpu.dimension_semantics<parallel>, #tpu.dimension_semantics<parallel>], iteration_bounds = array<i64: 1, 1>, scalar_prefetch = 0 : i64, scratch_operands = 0 : i64, tpu.core_type = #tpu.core_type<tc>, window_params = [{transform_indices = @transform_0, window_bounds = array<i64: 2, 256>}, {transform_indices = @transform_1, window_bounds = array<i64: 1, 256>}, {transform_indices = @transform_2, window_bounds = array<i64: 2, 256>}]} {
    %c0 = arith.constant 0 : index
    %c0_0 = arith.constant 0 : index
    %0 = vector.load %arg2[%c0, %c0_0] : memref<2x256xf32, #tpu.memory_space<vmem>>, vector<2x256xf32>
    %c0_1 = arith.constant 0 : index
    %c0_2 = arith.constant 0 : index
    %1 = vector.load %arg3[%c0_1, %c0_2] : memref<1x256xf32, #tpu.memory_space<vmem>>, vector<1x256xf32>
    %2 = vector.broadcast %1 : vector<1x256xf32> to vector<2x256xf32>
    %3 = arith.addf %0, %2 : vector<2x256xf32>
    %c0_3 = arith.constant 0 : index
    %c0_4 = arith.constant 0 : index
    %4 = vector.load %arg4[%c0_3, %c0_4] : memref<2x256xf32, #tpu.memory_space<vmem>>, vector<2x256xf32>
    tpu.vector_store %arg4[%c0_3, %c0_4], %3 {strides = array<i32>} : memref<2x256xf32, #tpu.memory_space<vmem>>, vector<2x256xf32>,
    return
  }
  func.func @transform_0(%arg0: i32, %arg1: i32) -> (i32, i32) {
    %c0_i32 = arith.constant 0 : i32
    return %arg1, %arg0 : i32, i32
  }
  func.func @transform_1(%arg0: i32, %arg1: i32) -> (i32, i32) {
    %c0_i32 = arith.constant 0 : i32
    %c0_i32_0 = arith.constant 0 : i32
    return %c0_i32, %arg0 : i32, i32
  }
  func.func @transform_2(%arg0: i32, %arg1: i32) -> (i32, i32) {
    %c0_i32 = arith.constant 0 : i32
    return %arg1, %arg0 : i32, i32
  }
}

</mosaic_0001>

<llo_original>
// kernel: tpu_custom_call.1
$region0: #{tpu_custom_call.1}
  #allocation0 [shape = 'u32[]', space=smem, size = 0x4, offset = 0x4, fixed_abs, tag = 'smem constant byte address 0x4 - core index']
  #allocation1 [shape = 'u32[144,128]{1,0:T(1,128)}', space=vmem, size = 0x12000, scoped, tag = 'internal scratch']
  %s0 = inlined_call_operand.hbm [shape: f32[2,256], index: 0, kind: input, shape index: {}]
  %s1 = inlined_call_operand.vmem [shape: f32[1,256], index: 1, kind: input, shape index: {}]
  %s2 = inlined_call_operand.hbm [shape: f32[2,256], index: 2, kind: output, shape index: {}]
  %s3 = sld [smem:[#allocation0]]
  $region22: #{tpu_custom_call.1} parent=0
    _
  %s5 = ssub.s32 1, %s3
  %s6 = scalar_select 0, %s5, %s3
  $region1: #{tpu_custom_call.1} parent=0
    #allocation2 [shape = 'u8[2048]{0}', space=vmem, size = 0x800, scoped, tag = 'input window, operand 0, single buffered']
    #allocation3 [shape = 's32[1]{0}', space=sflag, size = 0x4, scoped, tag = 'scoped memory for tpu_custom_call.1']
    #allocation4 [shape = 's32[1]{0}', space=sflag, size = 0x4, scoped, tag = 'scoped memory for tpu_custom_call.1']
    #allocation5 [shape = 'u8[2048]{0}', space=vmem, size = 0x800, scoped, tag = 'output window, operand 0, single buffered']
    %7 = vsyncpa [#allocation3], 0
    %8 = vsyncpa [#allocation4], 0
    // Predicated region
    $region2: #{tpu_custom_call.1} parent=1 // pred_check
      _
    $region3: #{tpu_custom_call.1} parent=1 // pred_check_branch
      %10 = sbr.rel (0) target = $region5
    $region4: #{tpu_custom_call.1} parent=1 // pred_region
      %s12 = ssub.s32 64, 64
      %13 = vsyncadd [#allocation3], %s12
      %s15 = sshll.u32 [#allocation2], 4
      %s16 = int_to_ptr.vmem [resolvable:$true] %s15
      %18 = dma.hbm_to_vmem [thread:$0]  %s0, 64, %s16, [#allocation3]
    $region5: #{tpu_custom_call.1} parent=1 // pred_fallthru
      _
    // Predicated region
    $region6: #{tpu_custom_call.1} parent=1 // pred_check
      _
    $region7: #{tpu_custom_call.1} parent=1 // pred_check_branch
      %20 = sbr.rel (0) target = $region9
    $region8: #{tpu_custom_call.1} parent=1 // pred_region
      _
    $region9: #{tpu_custom_call.1} parent=1 // pred_fallthru
      _
    // Predicated region
    $region10: #{tpu_custom_call.1} parent=1 // pred_check
      _
    $region11: #{tpu_custom_call.1} parent=1 // pred_check_branch
      %22 = sbr.rel (0) target = $region13
    $region12: #{tpu_custom_call.1} parent=1 // pred_region
      %23 = dma.done [#allocation3], 64
    $region13: #{tpu_custom_call.1} parent=1 // pred_fallthru
      _
    %v24 = vld [vmem:[#allocation2] sm:$0xf]
    %v25 = vld [vmem:[%s1] sm:$0x3]
    %v27 = vlaneseq
    %v28 = vshrl.u32 %v27, 7
    %v29 = vsub.s32 0, %v28
    %v30 = vrot.slane %v25, %v29
    %v31 = vlaneseq
    %v32 = vshrl.u32 %v31, 7
    %v33 = vsub.s32 1, %v32
    %v34 = vrot.slane %v25, %v33
    %v35 = vcombine.low %v30, %v34
    %v37 = vunpack.c.l.s4 1983009808
    %v38 = vunpack.c.0.s8 %v37
    %v39 = vlaneseq
    %v40 = vshrl.u32 %v39, 7
    %v41 = vsub.s32 %v38, %v40
    %v42 = vrot.slane %v35, %v41
    %v44 = vadd.f32 %v24, %v42
    %45 = vst [vmem:[#allocation5] sm:$0xf] %v44
    // Predicated region
    $region14: #{tpu_custom_call.1} parent=1 // pred_check
      _
    $region15: #{tpu_custom_call.1} parent=1 // pred_check_branch
      %47 = sbr.rel (0) target = $region17
    $region16: #{tpu_custom_call.1} parent=1 // pred_region
      %s49 = ssub.s32 64, 64
      %50 = vsyncadd [#allocation4], %s49
      %s52 = sshll.u32 [#allocation5], 4
      %s53 = int_to_ptr.vmem [resolvable:$true] %s52
      %55 = dma.vmem_to_hbm [thread:$0]  %s53, 64, %s2, [#allocation4]
    $region17: #{tpu_custom_call.1} parent=1 // pred_fallthru
      _
    // Predicated region
    $region18: #{tpu_custom_call.1} parent=1 // pred_check
      _
    $region19: #{tpu_custom_call.1} parent=1 // pred_check_branch
      %57 = sbr.rel (0) target = $region21
    $region20: #{tpu_custom_call.1} parent=1 // pred_region
      %58 = dma.done [#allocation4], 64
    $region21: #{tpu_custom_call.1} parent=1 // pred_fallthru
      _
    %59 = vsyncpa [#allocation3], 1
    %60 = vsyncpa [#allocation4], 1

</llo_original>
